<compile_context>
chip_gen: v5e
topology: v5e:2x2
jax: 0.10.0
libtpu: 0.0.40
codegen_flags: <defaults>
</compile_context>

<pallas_src>
import functools

import jax
import jax.numpy as jnp
from jax import lax
from jax.experimental import pallas as pl
from jax.experimental.pallas import tpu as pltpu

LANE = 128
SUBLANE = 8
# 512 rows x 128 lanes x 4 B = 256 KiB per row-plane tile; the 9-plane input
# block (2.25 MiB, double buffered) stays well inside v5e's 16 MiB scoped VMEM.
MAX_TILE_ROWS = 512
# Fused edge-loss kernel keeps the three edge-length planes resident in VMEM
# between phases; budget them so the whole kernel fits v5e's default scoped
# VMEM.  Bigger meshes take the two-pass path (also keeps v7x megacore).
FUSE_SCRATCH_BYTES = 8 * 1024 * 1024


def _round_up(x, m):
    return ((x + m - 1) // m) * m


def _plan_rows(n_elems, max_tile_rows=MAX_TILE_ROWS):
    """Lay n_elems out as (rows_p, 128).  Tile is as large as possible (per-step
    overhead amortization) while keeping >= 2 grid blocks when there is enough
    work, so 'parallel' grid axes can shard across both TensorCores on v7x."""
    rows = max(1, -(-n_elems // LANE))
    rows8 = _round_up(rows, SUBLANE)
    tile = min(max_tile_rows, rows8)
    if rows8 > SUBLANE:                      # enough rows to split in two
        tile = min(tile, _round_up(-(-rows8 // 2), SUBLANE))
    rows_p = _round_up(rows8, tile)
    return rows_p, tile


def _fold_to_8x128(a):
    """(tile_rows, 128) -> (8, 128) partial sum; pairwise tree of VPU adds."""
    parts = [a[k:k + SUBLANE] for k in range(0, a.shape[0], SUBLANE)]
    while len(parts) > 1:
        nxt = [parts[j] + parts[j + 1] for j in range(0, len(parts) - 1, 2)]
        if len(parts) % 2:
            nxt.append(parts[-1])
        parts = nxt
    return parts[0]


def _edge_lengths(tri_ref):
    """tri_ref rows are coord-major: [x0,x1,x2, y0,y1,y2, z0,z1,z2]."""
    x0, x1, x2 = tri_ref[0], tri_ref[1], tri_ref[2]
    y0, y1, y2 = tri_ref[3], tri_ref[4], tri_ref[5]
    z0, z1, z2 = tri_ref[6], tri_ref[7], tri_ref[8]

    def elen(dx, dy, dz):
        # TODO(synk): add an epsilon before wiring autodiff through this; sqrt
        # has an infinite gradient at zero-length (padded/degenerate) edges.
        return jnp.sqrt(dx * dx + dy * dy + dz * dz)

    e0 = elen(x0 - x1, y0 - y1, z0 - z1)
    e1 = elen(x1 - x2, y1 - y2, z1 - z2)
    e2 = elen(x2 - x0, y2 - y0, z2 - z0)
    return e0, e1, e2


def _tail_mask(shape, tile_index, n_valid):
    """True for lanes holding a real face, False for the padded tail lanes."""
    lin = (lax.broadcasted_iota(jnp.int32, shape, 0) * LANE
           + lax.broadcasted_iota(jnp.int32, shape, 1))
    remaining = n_valid - tile_index * (shape[0] * LANE)
    return lin < remaining


# --------------------------------------------------------------------------
# Fused edge-loss kernel: grid = (2, n_tiles), both axes serial.
# --------------------------------------------------------------------------
def _edge_loss_fused_kernel(tri_ref, out_ref, e0s, e1s, e2s, acc_ref, avg_sm,
                            *, n_faces):
    p = pl.program_id(0)     # phase: 0 = edges + global sums, 1 = |e - avg|
    i = pl.program_id(1)     # tile index

    @pl.when(jnp.logical_and(p == 0, i == 0))
    def _init():
        acc_ref[...] = jnp.zeros_like(acc_ref)

    @pl.when(p == 0)
    def _phase0():
        e0, e1, e2 = _edge_lengths(tri_ref)
        e0s[i] = e0
        e1s[i] = e1
        e2s[i] = e2
        acc_ref[0] = acc_ref[0] + _fold_to_8x128(e0 + e1 + e2)
        acc_ref[1] = acc_ref[1] + _fold_to_8x128(
            jnp.abs(e0 - e1) + jnp.abs(e1 - e2) + jnp.abs(e2 - e0))

    @pl.when(jnp.logical_and(p == 1, i == 0))
    def _compute_avg():
        avg = jnp.sum(acc_ref[0]) / jnp.float32(3 * n_faces)
        avg_sm[0] = avg
        acc_ref[3] = jnp.broadcast_to(avg, (SUBLANE, LANE))

    @pl.when(p == 1)
    def _phase1():
        avg = avg_sm[0]
        e0, e1, e2 = e0s[i], e1s[i], e2s[i]
        dev = jnp.abs(e0 - avg) + jnp.abs(e1 - avg) + jnp.abs(e2 - avg)
        dev = jnp.where(_tail_mask(dev.shape, i, n_faces), dev, 0.0)
        acc_ref[2] = acc_ref[2] + _fold_to_8x128(dev)

    out_ref[...] = acc_ref[...]


# --------------------------------------------------------------------------
# Two-pass fallback kernels (very large meshes): fully parallel grids.
# --------------------------------------------------------------------------
def _edge_pass1_kernel(tri_ref, e_ref, part_ref):
    e0, e1, e2 = _edge_lengths(tri_ref)
    e_ref[0] = e0
    e_ref[1] = e1
    e_ref[2] = e2
    part_ref[0, 0] = _fold_to_8x128(e0 + e1 + e2)
    part_ref[0, 1] = _fold_to_8x128(
        jnp.abs(e0 - e1) + jnp.abs(e1 - e2) + jnp.abs(e2 - e0))


def _edge_pass2_kernel(avg_ref, e_ref, part_ref, *, n_faces):
    i = pl.program_id(0)
    avg = avg_ref[0]
    e0, e1, e2 = e_ref[0], e_ref[1], e_ref[2]
    dev = jnp.abs(e0 - avg) + jnp.abs(e1 - avg) + jnp.abs(e2 - avg)
    dev = jnp.where(_tail_mask(dev.shape, i, n_faces), dev, 0.0)
    part_ref[0] = _fold_to_8x128(dev)


# --------------------------------------------------------------------------
# Wrapper: mesh_edge_loss_custom
# --------------------------------------------------------------------------
def _faces_to_planes(verts, faces, rows_p):
    """Lane-dense (9, rows_p, 128) slab, rows = [x0,x1,x2,y0,y1,y2,z0,z1,z2].
    Single lane-axis take on pre-transposed (3,V) verts; no (F,3,3)->(3,3,F)
    relayout of the 36F-byte slab."""
    F = faces.shape[0]
    Fp = rows_p * LANE
    vt = jnp.transpose(verts)                                       # (3, V)
    planes = jnp.take(vt, jnp.transpose(faces).reshape(-1), axis=1)  # (3, 3F)
    planes = planes.reshape(3, 3, F)                                 # coord, corner, face
    planes = jnp.pad(planes, ((0, 0), (0, 0), (0, Fp - F)))
    return planes.reshape(9, rows_p, LANE)


def mesh_edge_loss_custom(verts, faces):
    """verts: (V,3), faces: (F,3) int. Returns (loss, avg_len) f32 scalars."""
    faces = jnp.asarray(faces).astype(jnp.int32)
    verts = jnp.asarray(verts).astype(jnp.float32)
    F = int(faces.shape[0])
    if F == 0:                                   # empty mesh -> 0 (PyTorch semantics)
        z = jnp.float32(0.0)
        return z, z

    rows_p, tile = _plan_rows(F)
    n_tiles = rows_p // tile
    planes = _faces_to_planes(verts, faces, rows_p)

    e_scratch_bytes = 3 * rows_p * LANE * 4
    if e_scratch_bytes <= FUSE_SCRATCH_BYTES:
        # Fused single call: edge lengths stay resident in VMEM between phases
        # (no 12F-byte HBM write + re-read, one launch instead of two).
        parts = pl.pallas_call(
            functools.partial(_edge_loss_fused_kernel, n_faces=F),
            out_shape=jax.ShapeDtypeStruct((4, SUBLANE, LANE), jnp.float32),
            grid=(2, n_tiles),
            in_specs=[pl.BlockSpec(
                (9, tile, LANE),
                # phase 1 maps to the last phase-0 block -> zero re-fetch
                lambda p, i: (0, i * (1 - p) + (n_tiles - 1) * p, 0))],
            out_specs=pl.BlockSpec((4, SUBLANE, LANE), lambda p, i: (0, 0, 0)),
            scratch_shapes=[pltpu.VMEM((n_tiles, tile, LANE), jnp.float32),
                            pltpu.VMEM((n_tiles, tile, LANE), jnp.float32),
                            pltpu.VMEM((n_tiles, tile, LANE), jnp.float32),
                            pltpu.VMEM((4, SUBLANE, LANE), jnp.float32),
                            pltpu.SMEM((1,), jnp.float32)],
            compiler_params=pltpu.CompilerParams(
                dimension_semantics=("arbitrary", "arbitrary")),
        )(planes)
        sum_pair = jnp.sum(parts[1])
        sum_dev = jnp.sum(parts[2])
        avg_len = parts[3, 0, 0]
    else:
        # Two-pass fallback: keeps both grids fully "parallel" (v7x megacore)
        # at the cost of one HBM round trip of the edge-length planes.
        e_planes, part1 = pl.pallas_call(
            _edge_pass1_kernel,
            out_shape=(jax.ShapeDtypeStruct((3, rows_p, LANE), jnp.float32),
                       jax.ShapeDtypeStruct((n_tiles, 2, SUBLANE, LANE),
                                            jnp.float32)),
            grid=(n_tiles,),
            in_specs=[pl.BlockSpec((9, tile, LANE), lambda i: (0, i, 0))],
            out_specs=(pl.BlockSpec((3, tile, LANE), lambda i: (0, i, 0)),
                       pl.BlockSpec((1, 2, SUBLANE, LANE),
                                    lambda i: (i, 0, 0, 0))),
            compiler_params=pltpu.CompilerParams(
                dimension_semantics=("parallel",)),
        )(planes)
        sum_pair = jnp.sum(part1[:, 1])
        avg_len = jnp.sum(part1[:, 0]) / jnp.float32(3 * F)
        part2 = pl.pallas_call(
            functools.partial(_edge_pass2_kernel, n_faces=F),
            out_shape=jax.ShapeDtypeStruct((n_tiles, SUBLANE, LANE),
                                           jnp.float32),
            grid=(n_tiles,),
            in_specs=[pl.BlockSpec(memory_space=pltpu.MemorySpace.SMEM),
                      pl.BlockSpec((3, tile, LANE), lambda i: (0, i, 0))],
            out_specs=pl.BlockSpec((1, SUBLANE, LANE), lambda i: (i, 0, 0)),
            compiler_params=pltpu.CompilerParams(
                dimension_semantics=("parallel",)),
        )(avg_len.reshape(1), e_planes)
        sum_dev = jnp.sum(part2)

    loss = (sum_pair + sum_dev) / jnp.float32(F)
    return loss, avg_len


# --------------------------------------------------------------------------
# offset_verts(deform_verts * mask): flat lane-dense elementwise add.
# --------------------------------------------------------------------------
def _offset_kernel(v_ref, d_ref, o_ref):
    o_ref[...] = v_ref[...] + d_ref[...]


def offset_verts(verts, delta):
    """verts, delta: (V,3) -> verts + delta, (V,3) f32."""
    V = int(verts.shape[0])
    n = V * 3
    rows_p, tile = _plan_rows(n)
    Np = rows_p * LANE

    def prep(a):
        flat = jnp.asarray(a).astype(jnp.float32).reshape(-1)
        return jnp.pad(flat, (0, Np - n)).reshape(rows_p, LANE)

    out = pl.pallas_call(
        _offset_kernel,
        out_shape=jax.ShapeDtypeStruct((rows_p, LANE), jnp.float32),
        grid=(rows_p // tile,),
        in_specs=[pl.BlockSpec((tile, LANE), lambda i: (i, 0))] * 2,
        out_specs=pl.BlockSpec((tile, LANE), lambda i: (i, 0)),
        compiler_params=pltpu.CompilerParams(dimension_semantics=("parallel",)),
    )(prep(verts), prep(delta))
    return out.reshape(-1)[:n].reshape(V, 3)


# --------------------------------------------------------------------------
# Module-equivalent wrapper (single forward step of Mesh2PointOptimizer)
# --------------------------------------------------------------------------
class Mesh2PointOptimizerPallas:
    def __call__(self, src_vts, src_faces, trg_vts, trg_color,
                 return_verts=False, exclude_idx=None):
        src_vts = jnp.asarray(src_vts).astype(jnp.float32)
        deform_verts = jnp.zeros_like(src_vts)            # torch.full(..., 0.0)
        if exclude_idx is not None and len(exclude_idx) > 0:
            mask = jnp.ones_like(src_vts).at[jnp.asarray(exclude_idx), :].set(0.0)
            delta = deform_verts * mask
        else:
            delta = deform_verts                          # no mask HBM stream

        # new_src_mesh = src_mesh.offset_verts(deform_verts * mask)
        new_verts = offset_verts(src_vts, delta)

        # loss_edge2 = mesh_edge_loss_custom(new_src_mesh)
        loss_edge2, avg_len = mesh_edge_loss_custom(new_verts, src_faces)

        if return_verts:
            return new_verts, (loss_edge2, avg_len)
        return (new_verts, src_faces), (loss_edge2, avg_len)


# --------------------------------------------------------------------------
# Pure-JAX reference for correctness check of the kernel path
# --------------------------------------------------------------------------
def _ref_edge_loss(verts, faces):
    v0 = verts[faces[:, 0]]
    v1 = verts[faces[:, 1]]
    v2 = verts[faces[:, 2]]
    e0 = jnp.linalg.norm(v0 - v1, axis=1)
    e1 = jnp.linalg.norm(v1 - v2, axis=1)
    e2 = jnp.linalg.norm(v2 - v0, axis=1)
    avg = jnp.mean(e0 + e1 + e2) / 3.0
    loss = (jnp.mean(jnp.abs(e0 - e1)) + jnp.mean(jnp.abs(e1 - e2))
            + jnp.mean(jnp.abs(e2 - e0)) + jnp.mean(jnp.abs(e0 - avg))
            + jnp.mean(jnp.abs(e1 - avg)) + jnp.mean(jnp.abs(e2 - avg)))
    return loss, avg


if __name__ == "__main__":
    key = jax.random.PRNGKey(0)
    k1, k2, k3, k4 = jax.random.split(key, 4)

    V, F, P = 64, 96, 48                      # small synthetic mesh / pointcloud
    src_vts = jax.random.normal(k1, (V, 3), jnp.float32)
    src_faces = jax.random.randint(k2, (F, 3), 0, V, jnp.int32)
    trg_vts = jax.random.normal(k3, (P, 3), jnp.float32)
    trg_color = jax.random.uniform(k4, (P, 3), jnp.float32)

    model = Mesh2PointOptimizerPallas()
    new_verts, (loss_edge2, avg_len) = model(
        src_vts, src_faces, trg_vts, trg_color, return_verts=True)

    jax.block_until_ready((new_verts, loss_edge2, avg_len))

    # correctness check against pure-JAX reference
    ref_loss, ref_avg = _ref_edge_loss(new_verts, src_faces)
    assert jnp.allclose(loss_edge2, ref_loss, atol=1e-5, rtol=1e-5), (
        loss_edge2, ref_loss)
    assert jnp.allclose(avg_len, ref_avg, atol=1e-5, rtol=1e-5), (avg_len, ref_avg)
    assert jnp.allclose(new_verts, src_vts, atol=1e-6)   # zero deformation

    print("KERNEL_OK")
</pallas_src>

<mosaic_0001>
module attributes {stable_mosaic.version = 11 : i64} {
  func.func @_offset_kernel(%arg0: i32, %arg1: memref<8x128xf32, #tpu.memory_space<vmem>>, %arg2: memref<8x128xf32, #tpu.memory_space<vmem>>, %arg3: memref<8x128xf32, #tpu.memory_space<vmem>>) attributes {dimension_semantics = [#tpu.dimension_semantics<parallel>], iteration_bounds = array<i64: 1>, scalar_prefetch = 0 : i64, scratch_operands = 0 : i64, tpu.core_type = #tpu.core_type<tc>, window_params = [{transform_indices = @transform_0, window_bounds = array<i64: 8, 128>}, {transform_indices = @transform_1, window_bounds = array<i64: 8, 128>}, {transform_indices = @transform_2, window_bounds = array<i64: 8, 128>}]} {
    %c0 = arith.constant 0 : index
    %c0_0 = arith.constant 0 : index
    %0 = vector.load %arg1[%c0, %c0_0] : memref<8x128xf32, #tpu.memory_space<vmem>>, vector<8x128xf32>
    %c0_1 = arith.constant 0 : index
    %c0_2 = arith.constant 0 : index
    %1 = vector.load %arg2[%c0_1, %c0_2] : memref<8x128xf32, #tpu.memory_space<vmem>>, vector<8x128xf32>
    %2 = arith.addf %0, %1 : vector<8x128xf32>
    %c0_3 = arith.constant 0 : index
    %c0_4 = arith.constant 0 : index
    %3 = vector.load %arg3[%c0_3, %c0_4] : memref<8x128xf32, #tpu.memory_space<vmem>>, vector<8x128xf32>
    tpu.vector_store %arg3[%c0_3, %c0_4], %2 {strides = array<i32>} : memref<8x128xf32, #tpu.memory_space<vmem>>, vector<8x128xf32>,
    return
  }
  func.func @transform_0(%arg0: i32) -> (i32, i32) {
    %c0_i32 = arith.constant 0 : i32
    %c0_i32_0 = arith.constant 0 : i32
    return %arg0, %c0_i32 : i32, i32
  }
  func.func @transform_1(%arg0: i32) -> (i32, i32) {
    %c0_i32 = arith.constant 0 : i32
    %c0_i32_0 = arith.constant 0 : i32
    return %arg0, %c0_i32 : i32, i32
  }
  func.func @transform_2(%arg0: i32) -> (i32, i32) {
    %c0_i32 = arith.constant 0 : i32
    %c0_i32_0 = arith.constant 0 : i32
    return %arg0, %c0_i32 : i32, i32
  }
}

</mosaic_0001>

<llo_original>
// kernel: tpu_custom_call.1
$region0: #{tpu_custom_call.1}
  #allocation0 [shape = 'u32[]', space=smem, size = 0x4, offset = 0x4, fixed_abs, tag = 'smem constant byte address 0x4 - core index']
  #allocation1 [shape = 'u32[72,128]{1,0:T(1,128)}', space=vmem, size = 0x9000, scoped, tag = 'internal scratch']
  %s0 = inlined_call_operand.hbm [shape: f32[8,128], index: 0, kind: input, shape index: {}]
  %s1 = inlined_call_operand.hbm [shape: f32[8,128], index: 1, kind: input, shape index: {}]
  %s2 = inlined_call_operand.hbm [shape: f32[8,128], index: 2, kind: output, shape index: {}]
  %s3 = sld [smem:[#allocation0]]
  $region26: #{tpu_custom_call.1} parent=0
    _
  %s5 = ssub.s32 1, %s3
  %s6 = scalar_select 0, %s5, %s3
  $region1: #{tpu_custom_call.1} parent=0
    #allocation2 [shape = 'u8[4096]{0}', space=vmem, size = 0x1000, scoped, tag = 'input window, operand 0, single buffered']
    #allocation3 [shape = 's32[1]{0}', space=sflag, size = 0x4, scoped, tag = 'scoped memory for tpu_custom_call.1']
    #allocation4 [shape = 's32[1]{0}', space=sflag, size = 0x4, scoped, tag = 'scoped memory for tpu_custom_call.1']
    #allocation5 [shape = 'u8[4096]{0}', space=vmem, size = 0x1000, scoped, tag = 'input window, operand 1, single buffered']
    #allocation6 [shape = 's32[1]{0}', space=sflag, size = 0x4, scoped, tag = 'scoped memory for tpu_custom_call.1']
    #allocation7 [shape = 'u8[4096]{0}', space=vmem, size = 0x1000, scoped, tag = 'output window, operand 0, single buffered']
    %7 = vsyncpa [#allocation3], 0
    %8 = vsyncpa [#allocation6], 0
    %9 = vsyncpa [#allocation4], 0
    // Predicated region
    $region2: #{tpu_custom_call.1} parent=1 // pred_check
      _
    $region3: #{tpu_custom_call.1} parent=1 // pred_check_branch
      %11 = sbr.rel (0) target = $region5
    $region4: #{tpu_custom_call.1} parent=1 // pred_region
      %13 = vsyncadd [#allocation3], 0
      %s15 = sshll.u32 %s0, 4
      %s16 = int_to_ptr.hbm [resolvable:$true] %s15
      %s17 = sshll.u32 [#allocation2], 4
      %s18 = int_to_ptr.vmem [resolvable:$true] %s17
      %20 = dma.hbm_to_vmem [thread:$0]  %s16, 128, %s18, [#allocation3]
    $region5: #{tpu_custom_call.1} parent=1 // pred_fallthru
      _
    // Predicated region
    $region6: #{tpu_custom_call.1} parent=1 // pred_check
      _
    $region7: #{tpu_custom_call.1} parent=1 // pred_check_branch
      %22 = sbr.rel (0) target = $region9
    $region8: #{tpu_custom_call.1} parent=1 // pred_region
      %24 = vsyncadd [#allocation6], 0
      %s26 = sshll.u32 %s1, 4
      %s27 = int_to_ptr.hbm [resolvable:$true] %s26
      %s28 = sshll.u32 [#allocation5], 4
      %s29 = int_to_ptr.vmem [resolvable:$true] %s28
      %31 = dma.hbm_to_vmem [thread:$0]  %s27, 128, %s29, [#allocation6]
    $region9: #{tpu_custom_call.1} parent=1 // pred_fallthru
      _
    // Predicated region
    $region10: #{tpu_custom_call.1} parent=1 // pred_check
      _
    $region11: #{tpu_custom_call.1} parent=1 // pred_check_branch
      %33 = sbr.rel (0) target = $region13
    $region12: #{tpu_custom_call.1} parent=1 // pred_region
      %35 = dma.done [#allocation3], 128
    $region13: #{tpu_custom_call.1} parent=1 // pred_fallthru
      _
    // Predicated region
    $region14: #{tpu_custom_call.1} parent=1 // pred_check
      _
    $region15: #{tpu_custom_call.1} parent=1 // pred_check_branch
      %37 = sbr.rel (0) target = $region17
    $region16: #{tpu_custom_call.1} parent=1 // pred_region
      %39 = dma.done [#allocation6], 128
    $region17: #{tpu_custom_call.1} parent=1 // pred_fallthru
      _
    %v40 = vld [vmem:[#allocation2] sm:$0xff]
    %v41 = vld [vmem:[#allocation5] sm:$0xff]
    %v42 = vadd.f32 %v40, %v41
    %43 = vst [vmem:[#allocation7] sm:$0xff] %v42
    // Predicated region
    $region18: #{tpu_custom_call.1} parent=1 // pred_check
      _
    $region19: #{tpu_custom_call.1} parent=1 // pred_check_branch
      %45 = sbr.rel (0) target = $region21
    $region20: #{tpu_custom_call.1} parent=1 // pred_region
      %47 = vsyncadd [#allocation4], 0
      %s49 = sshll.u32 [#allocation7], 4
      %s50 = int_to_ptr.vmem [resolvable:$true] %s49
      %s51 = sshll.u32 %s2, 4
      %s52 = int_to_ptr.hbm [resolvable:$true] %s51
      %54 = dma.vmem_to_hbm [thread:$0]  %s50, 128, %s52, [#allocation4]
    $region21: #{tpu_custom_call.1} parent=1 // pred_fallthru
      _
    // Predicated region
    $region22: #{tpu_custom_call.1} parent=1 // pred_check
      _
    $region23: #{tpu_custom_call.1} parent=1 // pred_check_branch
      %56 = sbr.rel (0) target = $region25
    $region24: #{tpu_custom_call.1} parent=1 // pred_region
      %58 = dma.done [#allocation4], 128
    $region25: #{tpu_custom_call.1} parent=1 // pred_fallthru
      _
    %59 = vsyncpa [#allocation3], 1
    %60 = vsyncpa [#allocation6], 1
    %61 = vsyncpa [#allocation4], 1

</llo_original>
